<compile_context>
chip_gen: v7x
topology: tpu7x:2x2x1
jax: 0.10.0
libtpu: 0.0.40
codegen_flags: <defaults>
</compile_context>

<pallas_src>
import jax
import jax.numpy as jnp
from jax.experimental import pallas as pl
from jax.experimental.pallas import tpu as pltpu


def _lstm_kernel(x_ref, wih_ref, whh_ref, b_ref, state_ref, out_ref, xw_ref):
    """Single-layer LSTM over the full sequence, batch = 1.

    x_ref     : (T, D)   f32
    wih_ref   : (D, 4H)  f32  (= W_ih^T)
    whh_ref   : (H, 4H)  f32  (= W_hh^T)
    b_ref     : (1, 4H)  f32  (= b_ih + b_hh)
    state_ref : (2, H)   f32  row 0 = h_0, row 1 = c_0
    out_ref   : (2, H)   f32  row 0 = h_T, row 1 = c_T   (aliased with state_ref's buffer)
    xw_ref    : (T, 4H)  f32  VMEM scratch for the hoisted input projection
    """
    T = x_ref.shape[0]
    H = state_ref.shape[1]

    # Hoisted input projection + fused bias: one MXU push for the whole
    # sequence, stored to VMEM scratch so per-step rows come from the (idle)
    # load slot instead of vreg sublane extraction on the critical path.
    xw_ref[...] = (
        jnp.dot(x_ref[...], wih_ref[...], preferred_element_type=jnp.float32)
        + b_ref[...]
    )

    whh = whh_ref[...]            # (H, 4H), loaded once; RHS of every step.
    h = state_ref[0:1, :]         # (1, H)
    c = state_ref[1:2, :]         # (1, H)

    # Fully unrolled recurrence (T is static and tiny) so the LLO scheduler can
    # overlap adjacent steps' MXU pushes, EUP activations and VPU updates.
    # TODO(synk): keep W_hh staged in the MXU across the unrolled steps via
    # pltpu.matmul_push_rhs / matmul_acc_lhs / matmul_pop (and, on v7x, fold
    # xw[t] into the MRB accumulator) once the (1,32)x(32,128) shape
    # constraints of the explicit-MXU path are confirmed on all targets.
    for t in range(T):
        x_row = xw_ref[t:t + 1, :]                                    # (1, 4H)
        gates = x_row + jnp.dot(h, whh, preferred_element_type=jnp.float32)
        sig = jax.nn.sigmoid(gates)   # one full-vreg EUP pass covers i, f, o
        th = jnp.tanh(gates)          # one full-vreg EUP pass covers g
        i_g = sig[:, 0 * H:1 * H]
        f_g = sig[:, 1 * H:2 * H]
        g_g = th[:, 2 * H:3 * H]
        o_g = sig[:, 3 * H:4 * H]
        c = f_g * c + i_g * g_g
        h = o_g * jnp.tanh(c)

    out_ref[0:1, :] = h
    out_ref[1:2, :] = c


def prepare_encoder_params(params):
    """One-time parameter prep, hoisted out of the per-call path."""
    H = params["w_hh"].shape[1]
    return {
        "wih_t": params["w_ih"].T.astype(jnp.float32),                 # (D, 4H)
        "whh_t": params["w_hh"].T.astype(jnp.float32),                 # (H, 4H)
        "bias": (params["b_ih"] + params["b_hh"]).reshape(1, 4 * H)
                 .astype(jnp.float32),                                 # (1, 4H)
    }


def pack_state(h_n, c_n):
    """(1,1,H) hidden + cell state -> single (2, H) carried-state array."""
    H = h_n.shape[-1]
    return jnp.concatenate(
        [h_n.reshape(1, H), c_n.reshape(1, H)], axis=0).astype(jnp.float32)


def lstm_encoder_forward(x_sample, prepared, state):
    """Mirrors Encoder.forward.

    x_sample : (1, T, D)  (stateful hidden state is (1,1,H) -> batch must be 1)
    prepared : dict from prepare_encoder_params
    state    : (2, H)     rows = (h_n, c_n)

    Returns (output_last (1, H), h_n (1,1,H), c_n (1,1,H), new_state (2, H)).
    """
    B, T, D = x_sample.shape
    assert B == 1, "stateful Encoder keeps a (1,1,H) hidden state -> batch must be 1"
    # TODO(synk): if multiple independent sequences exist, batch them into the
    # M dimension of both matmuls (and add a 'parallel' grid axis for the v7x
    # second TensorCore) instead of running separate kernels.
    H = prepared["whh_t"].shape[0]
    x = x_sample.reshape(T, D).astype(jnp.float32)

    vmem = pl.BlockSpec(memory_space=pltpu.MemorySpace.VMEM)

    new_state = pl.pallas_call(
        _lstm_kernel,
        out_shape=jax.ShapeDtypeStruct((2, H), jnp.float32),
        in_specs=[vmem] * 5,
        out_specs=vmem,
        scratch_shapes=[pltpu.VMEM((T, 4 * H), jnp.float32)],
        input_output_aliases={4: 0},   # carried (h, c) state re-uses its buffer
    )(x, prepared["wih_t"], prepared["whh_t"], prepared["bias"], state)

    # PyTorch: output.view(-1, H)[-1].unsqueeze(0) is exactly the final hidden
    # state h_n for a single-layer unidirectional LSTM.
    output_last = new_state[0:1, :]
    h_n = new_state[0].reshape(1, 1, H)
    c_n = new_state[1].reshape(1, 1, H)
    return output_last, h_n, c_n, new_state


def init_encoder_params(key, input_shape, hidden_units):
    """Deterministic nn.LSTM-style init: uniform(-1/sqrt(H), 1/sqrt(H))."""
    k = 1.0 / jnp.sqrt(jnp.float32(hidden_units))
    k1, k2, k3, k4 = jax.random.split(key, 4)
    return {
        "w_ih": jax.random.uniform(k1, (4 * hidden_units, input_shape),
                                   jnp.float32, -k, k),
        "w_hh": jax.random.uniform(k2, (4 * hidden_units, hidden_units),
                                   jnp.float32, -k, k),
        "b_ih": jax.random.uniform(k3, (4 * hidden_units,), jnp.float32, -k, k),
        "b_hh": jax.random.uniform(k4, (4 * hidden_units,), jnp.float32, -k, k),
    }


def _reference_lstm(x_sample, params, h_n, c_n):
    """Pure-JAX reference implementing the same PyTorch LSTM semantics."""
    B, T, D = x_sample.shape
    H = params["w_hh"].shape[1]
    x = x_sample.reshape(T, D)
    h = h_n.reshape(1, H)
    c = c_n.reshape(1, H)
    outs = []
    for t in range(T):
        g = (x[t:t + 1] @ params["w_ih"].T + params["b_ih"]
             + h @ params["w_hh"].T + params["b_hh"])
        i = jax.nn.sigmoid(g[:, 0 * H:1 * H])
        f = jax.nn.sigmoid(g[:, 1 * H:2 * H])
        gg = jnp.tanh(g[:, 2 * H:3 * H])
        o = jax.nn.sigmoid(g[:, 3 * H:4 * H])
        c = f * c + i * gg
        h = o * jnp.tanh(c)
        outs.append(h)
    out = jnp.concatenate(outs, axis=0)
    return out[-1:, :], h.reshape(1, 1, H), c.reshape(1, 1, H)


if __name__ == "__main__":
    INPUT_SHAPE = 16   # features per timestep
    HIDDEN_UNITS = 32
    SEQ_LEN = 8
    BATCH = 1          # stateful Encoder keeps (1,1,H) states -> batch of 1

    key = jax.random.PRNGKey(0)
    k_param, k_x = jax.random.split(key)

    params = init_encoder_params(k_param, INPUT_SHAPE, HIDDEN_UNITS)
    prepared = prepare_encoder_params(params)   # one-time, out of per-call path

    x_sample = jax.random.normal(k_x, (BATCH, SEQ_LEN, INPUT_SHAPE), jnp.float32)
    h_n = jnp.zeros((1, 1, HIDDEN_UNITS), jnp.float32)
    c_n = jnp.zeros((1, 1, HIDDEN_UNITS), jnp.float32)
    state = pack_state(h_n, c_n)

    fwd = jax.jit(lstm_encoder_forward)

    # --- call 1 (fresh state) ---
    output, h_n_new, c_n_new, state = fwd(x_sample, prepared, state)
    jax.block_until_ready((output, h_n_new, c_n_new, state))

    ref_out, ref_h, ref_c = _reference_lstm(x_sample, params, h_n, c_n)
    assert jnp.allclose(output, ref_out, atol=1e-5), "output mismatch"
    assert jnp.allclose(h_n_new, ref_h, atol=1e-5), "h_n mismatch"
    assert jnp.allclose(c_n_new, ref_c, atol=1e-5), "c_n mismatch"
    assert output.shape == (1, HIDDEN_UNITS)
    assert h_n_new.shape == (1, 1, HIDDEN_UNITS)
    assert c_n_new.shape == (1, 1, HIDDEN_UNITS)

    # --- call 2 (carried state, exercises the stateful path) ---
    x_sample2 = jax.random.normal(jax.random.PRNGKey(1),
                                  (BATCH, SEQ_LEN, INPUT_SHAPE), jnp.float32)
    output2, h_n_new2, c_n_new2, state = fwd(x_sample2, prepared, state)
    jax.block_until_ready((output2, h_n_new2, c_n_new2, state))

    ref_out2, ref_h2, ref_c2 = _reference_lstm(x_sample2, params, ref_h, ref_c)
    assert jnp.allclose(output2, ref_out2, atol=1e-5), "output mismatch (call 2)"
    assert jnp.allclose(h_n_new2, ref_h2, atol=1e-5), "h_n mismatch (call 2)"
    assert jnp.allclose(c_n_new2, ref_c2, atol=1e-5), "c_n mismatch (call 2)"

    print("KERNEL_OK")
</pallas_src>

<mosaic_0001>
module attributes {stable_mosaic.version = 11 : i64} {
  func.func @_lstm_kernel(%arg0: memref<8x16xf32, #tpu.memory_space<vmem>>, %arg1: memref<16x128xf32, #tpu.memory_space<vmem>>, %arg2: memref<32x128xf32, #tpu.memory_space<vmem>>, %arg3: memref<1x128xf32, #tpu.memory_space<vmem>>, %arg4: memref<2x32xf32, #tpu.memory_space<vmem>>, %arg5: memref<2x32xf32, #tpu.memory_space<vmem>>, %arg6: memref<8x128xf32, #tpu.memory_space<vmem>>) attributes {dimension_semantics = [], scalar_prefetch = 0 : i64, scratch_operands = 1 : i64, tpu.core_type = #tpu.core_type<tc>} {
    %c0 = arith.constant 0 : index
    %c0_0 = arith.constant 0 : index
    %0 = vector.load %arg0[%c0, %c0_0] : memref<8x16xf32, #tpu.memory_space<vmem>>, vector<8x16xf32>
    %c0_1 = arith.constant 0 : index
    %c0_2 = arith.constant 0 : index
    %1 = vector.load %arg1[%c0_1, %c0_2] : memref<16x128xf32, #tpu.memory_space<vmem>>, vector<16x128xf32>
    %cst = arith.constant dense<0.000000e+00> : vector<8x128xf32>
    %2 = tpu.matmul %0, %1, %cst {dimension_numbers = #tpu.dot_dimension_numbers<[1], [0], [0], [1], [0, 0, 1, 1], [], []>} : vector<8x16xf32>, vector<16x128xf32>, vector<8x128xf32> -> vector<8x128xf32>
    %c0_3 = arith.constant 0 : index
    %c0_4 = arith.constant 0 : index
    %3 = vector.load %arg3[%c0_3, %c0_4] : memref<1x128xf32, #tpu.memory_space<vmem>>, vector<1x128xf32>
    %4 = vector.broadcast %3 : vector<1x128xf32> to vector<8x128xf32>
    %5 = arith.addf %2, %4 : vector<8x128xf32>
    %c0_5 = arith.constant 0 : index
    %c0_6 = arith.constant 0 : index
    %6 = vector.load %arg6[%c0_5, %c0_6] : memref<8x128xf32, #tpu.memory_space<vmem>>, vector<8x128xf32>
    tpu.vector_store %arg6[%c0_5, %c0_6], %5 {strides = array<i32>} : memref<8x128xf32, #tpu.memory_space<vmem>>, vector<8x128xf32>,
    %c0_7 = arith.constant 0 : index
    %c0_8 = arith.constant 0 : index
    %7 = vector.load %arg2[%c0_7, %c0_8] : memref<32x128xf32, #tpu.memory_space<vmem>>, vector<32x128xf32>
    %c0_9 = arith.constant 0 : index
    %c0_10 = arith.constant 0 : index
    %8 = vector.load %arg4[%c0_9, %c0_10] : memref<2x32xf32, #tpu.memory_space<vmem>>, vector<1x32xf32>
    %c1 = arith.constant 1 : index
    %c0_11 = arith.constant 0 : index
    %9 = vector.load %arg4[%c1, %c0_11] : memref<2x32xf32, #tpu.memory_space<vmem>>, vector<1x32xf32>
    %c0_12 = arith.constant 0 : index
    %c0_13 = arith.constant 0 : index
    %10 = vector.load %arg6[%c0_12, %c0_13] : memref<8x128xf32, #tpu.memory_space<vmem>>, vector<1x128xf32>
    %cst_14 = arith.constant dense<0.000000e+00> : vector<1x128xf32>
    %11 = tpu.matmul %8, %7, %cst_14 {dimension_numbers = #tpu.dot_dimension_numbers<[1], [0], [0], [1], [0, 0, 1, 1], [], []>} : vector<1x32xf32>, vector<32x128xf32>, vector<1x128xf32> -> vector<1x128xf32>
    %12 = arith.addf %10, %11 : vector<1x128xf32>
    %13 = arith.negf %12 : vector<1x128xf32>
    %14 = math.exp %13 : vector<1x128xf32>
    %cst_15 = arith.constant 1.000000e+00 : f32
    %15 = vector.broadcast %cst_15 : f32 to vector<1x128xf32>
    %16 = arith.addf %15, %14 : vector<1x128xf32>
    %17 = arith.divf %15, %16 : vector<1x128xf32>
    %18 = math.tanh %12 : vector<1x128xf32>
    %19 = vector.extract_strided_slice %17 {offsets = [0, 0], sizes = [1, 32], strides = [1, 1]} : vector<1x128xf32> to vector<1x32xf32>
    %20 = vector.extract_strided_slice %17 {offsets = [0, 32], sizes = [1, 32], strides = [1, 1]} : vector<1x128xf32> to vector<1x32xf32>
    %21 = vector.extract_strided_slice %18 {offsets = [0, 64], sizes = [1, 32], strides = [1, 1]} : vector<1x128xf32> to vector<1x32xf32>
    %22 = vector.extract_strided_slice %17 {offsets = [0, 96], sizes = [1, 32], strides = [1, 1]} : vector<1x128xf32> to vector<1x32xf32>
    %23 = arith.mulf %20, %9 : vector<1x32xf32>
    %24 = arith.mulf %19, %21 : vector<1x32xf32>
    %25 = arith.addf %23, %24 : vector<1x32xf32>
    %26 = math.tanh %25 : vector<1x32xf32>
    %27 = arith.mulf %22, %26 : vector<1x32xf32>
    %c1_16 = arith.constant 1 : index
    %c0_17 = arith.constant 0 : index
    %28 = vector.load %arg6[%c1_16, %c0_17] : memref<8x128xf32, #tpu.memory_space<vmem>>, vector<1x128xf32>
    %cst_18 = arith.constant dense<0.000000e+00> : vector<1x128xf32>
    %29 = tpu.matmul %27, %7, %cst_18 {dimension_numbers = #tpu.dot_dimension_numbers<[1], [0], [0], [1], [0, 0, 1, 1], [], []>} : vector<1x32xf32>, vector<32x128xf32>, vector<1x128xf32> -> vector<1x128xf32>
    %30 = arith.addf %28, %29 : vector<1x128xf32>
    %31 = arith.negf %30 : vector<1x128xf32>
    %32 = math.exp %31 : vector<1x128xf32>
    %cst_19 = arith.constant 1.000000e+00 : f32
    %33 = vector.broadcast %cst_19 : f32 to vector<1x128xf32>
    %34 = arith.addf %33, %32 : vector<1x128xf32>
    %35 = arith.divf %33, %34 : vector<1x128xf32>
    %36 = math.tanh %30 : vector<1x128xf32>
    %37 = vector.extract_strided_slice %35 {offsets = [0, 0], sizes = [1, 32], strides = [1, 1]} : vector<1x128xf32> to vector<1x32xf32>
    %38 = vector.extract_strided_slice %35 {offsets = [0, 32], sizes = [1, 32], strides = [1, 1]} : vector<1x128xf32> to vector<1x32xf32>
    %39 = vector.extract_strided_slice %36 {offsets = [0, 64], sizes = [1, 32], strides = [1, 1]} : vector<1x128xf32> to vector<1x32xf32>
    %40 = vector.extract_strided_slice %35 {offsets = [0, 96], sizes = [1, 32], strides = [1, 1]} : vector<1x128xf32> to vector<1x32xf32>
    %41 = arith.mulf %38, %25 : vector<1x32xf32>
    %42 = arith.mulf %37, %39 : vector<1x32xf32>
    %43 = arith.addf %41, %42 : vector<1x32xf32>
    %44 = math.tanh %43 : vector<1x32xf32>
    %45 = arith.mulf %40, %44 : vector<1x32xf32>
    %c2 = arith.constant 2 : index
    %c0_20 = arith.constant 0 : index
    %46 = vector.load %arg6[%c2, %c0_20] : memref<8x128xf32, #tpu.memory_space<vmem>>, vector<1x128xf32>
    %cst_21 = arith.constant dense<0.000000e+00> : vector<1x128xf32>
    %47 = tpu.matmul %45, %7, %cst_21 {dimension_numbers = #tpu.dot_dimension_numbers<[1], [0], [0], [1], [0, 0, 1, 1], [], []>} : vector<1x32xf32>, vector<32x128xf32>, vector<1x128xf32> -> vector<1x128xf32>
    %48 = arith.addf %46, %47 : vector<1x128xf32>
    %49 = arith.negf %48 : vector<1x128xf32>
    %50 = math.exp %49 : vector<1x128xf32>
    %cst_22 = arith.constant 1.000000e+00 : f32
    %51 = vector.broadcast %cst_22 : f32 to vector<1x128xf32>
    %52 = arith.addf %51, %50 : vector<1x128xf32>
    %53 = arith.divf %51, %52 : vector<1x128xf32>
    %54 = math.tanh %48 : vector<1x128xf32>
    %55 = vector.extract_strided_slice %53 {offsets = [0, 0], sizes = [1, 32], strides = [1, 1]} : vector<1x128xf32> to vector<1x32xf32>
    %56 = vector.extract_strided_slice %53 {offsets = [0, 32], sizes = [1, 32], strides = [1, 1]} : vector<1x128xf32> to vector<1x32xf32>
    %57 = vector.extract_strided_slice %54 {offsets = [0, 64], sizes = [1, 32], strides = [1, 1]} : vector<1x128xf32> to vector<1x32xf32>
    %58 = vector.extract_strided_slice %53 {offsets = [0, 96], sizes = [1, 32], strides = [1, 1]} : vector<1x128xf32> to vector<1x32xf32>
    %59 = arith.mulf %56, %43 : vector<1x32xf32>
    %60 = arith.mulf %55, %57 : vector<1x32xf32>
    %61 = arith.addf %59, %60 : vector<1x32xf32>
    %62 = math.tanh %61 : vector<1x32xf32>
    %63 = arith.mulf %58, %62 : vector<1x32xf32>
    %c3 = arith.constant 3 : index
    %c0_23 = arith.constant 0 : index
    %64 = vector.load %arg6[%c3, %c0_23] : memref<8x128xf32, #tpu.memory_space<vmem>>, vector<1x128xf32>
    %cst_24 = arith.constant dense<0.000000e+00> : vector<1x128xf32>
    %65 = tpu.matmul %63, %7, %cst_24 {dimension_numbers = #tpu.dot_dimension_numbers<[1], [0], [0], [1], [0, 0, 1, 1], [], []>} : vector<1x32xf32>, vector<32x128xf32>, vector<1x128xf32> -> vector<1x128xf32>
    %66 = arith.addf %64, %65 : vector<1x128xf32>
    %67 = arith.negf %66 : vector<1x128xf32>
    %68 = math.exp %67 : vector<1x128xf32>
    %cst_25 = arith.constant 1.000000e+00 : f32
    %69 = vector.broadcast %cst_25 : f32 to vector<1x128xf32>
    %70 = arith.addf %69, %68 : vector<1x128xf32>
    %71 = arith.divf %69, %70 : vector<1x128xf32>
    %72 = math.tanh %66 : vector<1x128xf32>
    %73 = vector.extract_strided_slice %71 {offsets = [0, 0], sizes = [1, 32], strides = [1, 1]} : vector<1x128xf32> to vector<1x32xf32>
    %74 = vector.extract_strided_slice %71 {offsets = [0, 32], sizes = [1, 32], strides = [1, 1]} : vector<1x128xf32> to vector<1x32xf32>
    %75 = vector.extract_strided_slice %72 {offsets = [0, 64], sizes = [1, 32], strides = [1, 1]} : vector<1x128xf32> to vector<1x32xf32>
    %76 = vector.extract_strided_slice %71 {offsets = [0, 96], sizes = [1, 32], strides = [1, 1]} : vector<1x128xf32> to vector<1x32xf32>
    %77 = arith.mulf %74, %61 : vector<1x32xf32>
    %78 = arith.mulf %73, %75 : vector<1x32xf32>
    %79 = arith.addf %77, %78 : vector<1x32xf32>
    %80 = math.tanh %79 : vector<1x32xf32>
    %81 = arith.mulf %76, %80 : vector<1x32xf32>
    %c4 = arith.constant 4 : index
    %c0_26 = arith.constant 0 : index
    %82 = vector.load %arg6[%c4, %c0_26] : memref<8x128xf32, #tpu.memory_space<vmem>>, vector<1x128xf32>
    %cst_27 = arith.constant dense<0.000000e+00> : vector<1x128xf32>
    %83 = tpu.matmul %81, %7, %cst_27 {dimension_numbers = #tpu.dot_dimension_numbers<[1], [0], [0], [1], [0, 0, 1, 1], [], []>} : vector<1x32xf32>, vector<32x128xf32>, vector<1x128xf32> -> vector<1x128xf32>
    %84 = arith.addf %82, %83 : vector<1x128xf32>
    %85 = arith.negf %84 : vector<1x128xf32>
    %86 = math.exp %85 : vector<1x128xf32>
    %cst_28 = arith.constant 1.000000e+00 : f32
    %87 = vector.broadcast %cst_28 : f32 to vector<1x128xf32>
    %88 = arith.addf %87, %86 : vector<1x128xf32>
    %89 = arith.divf %87, %88 : vector<1x128xf32>
    %90 = math.tanh %84 : vector<1x128xf32>
    %91 = vector.extract_strided_slice %89 {offsets = [0, 0], sizes = [1, 32], strides = [1, 1]} : vector<1x128xf32> to vector<1x32xf32>
    %92 = vector.extract_strided_slice %89 {offsets = [0, 32], sizes = [1, 32], strides = [1, 1]} : vector<1x128xf32> to vector<1x32xf32>
    %93 = vector.extract_strided_slice %90 {offsets = [0, 64], sizes = [1, 32], strides = [1, 1]} : vector<1x128xf32> to vector<1x32xf32>
    %94 = vector.extract_strided_slice %89 {offsets = [0, 96], sizes = [1, 32], strides = [1, 1]} : vector<1x128xf32> to vector<1x32xf32>
    %95 = arith.mulf %92, %79 : vector<1x32xf32>
    %96 = arith.mulf %91, %93 : vector<1x32xf32>
    %97 = arith.addf %95, %96 : vector<1x32xf32>
    %98 = math.tanh %97 : vector<1x32xf32>
    %99 = arith.mulf %94, %98 : vector<1x32xf32>
    %c5 = arith.constant 5 : index
    %c0_29 = arith.constant 0 : index
    %100 = vector.load %arg6[%c5, %c0_29] : memref<8x128xf32, #tpu.memory_space<vmem>>, vector<1x128xf32>
    %cst_30 = arith.constant dense<0.000000e+00> : vector<1x128xf32>
    %101 = tpu.matmul %99, %7, %cst_30 {dimension_numbers = #tpu.dot_dimension_numbers<[1], [0], [0], [1], [0, 0, 1, 1], [], []>} : vector<1x32xf32>, vector<32x128xf32>, vector<1x128xf32> -> vector<1x128xf32>
    %102 = arith.addf %100, %101 : vector<1x128xf32>
    %103 = arith.negf %102 : vector<1x128xf32>
    %104 = math.exp %103 : vector<1x128xf32>
    %cst_31 = arith.constant 1.000000e+00 : f32
    %105 = vector.broadcast %cst_31 : f32 to vector<1x128xf32>
    %106 = arith.addf %105, %104 : vector<1x128xf32>
    %107 = arith.divf %105, %106 : vector<1x128xf32>
    %108 = math.tanh %102 : vector<1x128xf32>
    %109 = vector.extract_strided_slice %107 {offsets = [0, 0], sizes = [1, 32], strides = [1, 1]} : vector<1x128xf32> to vector<1x32xf32>
    %110 = vector.extract_strided_slice %107 {offsets = [0, 32], sizes = [1, 32], strides = [1, 1]} : vector<1x128xf32> to vector<1x32xf32>
    %111 = vector.extract_strided_slice %108 {offsets = [0, 64], sizes = [1, 32], strides = [1, 1]} : vector<1x128xf32> to vector<1x32xf32>
    %112 = vector.extract_strided_slice %107 {offsets = [0, 96], sizes = [1, 32], strides = [1, 1]} : vector<1x128xf32> to vector<1x32xf32>
    %113 = arith.mulf %110, %97 : vector<1x32xf32>
    %114 = arith.mulf %109, %111 : vector<1x32xf32>
    %115 = arith.addf %113, %114 : vector<1x32xf32>
    %116 = math.tanh %115 : vector<1x32xf32>
    %117 = arith.mulf %112, %116 : vector<1x32xf32>
    %c6 = arith.constant 6 : index
    %c0_32 = arith.constant 0 : index
    %118 = vector.load %arg6[%c6, %c0_32] : memref<8x128xf32, #tpu.memory_space<vmem>>, vector<1x128xf32>
    %cst_33 = arith.constant dense<0.000000e+00> : vector<1x128xf32>
    %119 = tpu.matmul %117, %7, %cst_33 {dimension_numbers = #tpu.dot_dimension_numbers<[1], [0], [0], [1], [0, 0, 1, 1], [], []>} : vector<1x32xf32>, vector<32x128xf32>, vector<1x128xf32> -> vector<1x128xf32>
    %120 = arith.addf %118, %119 : vector<1x128xf32>
    %121 = arith.negf %120 : vector<1x128xf32>
    %122 = math.exp %121 : vector<1x128xf32>
    %cst_34 = arith.constant 1.000000e+00 : f32
    %123 = vector.broadcast %cst_34 : f32 to vector<1x128xf32>
    %124 = arith.addf %123, %122 : vector<1x128xf32>
    %125 = arith.divf %123, %124 : vector<1x128xf32>
    %126 = math.tanh %120 : vector<1x128xf32>
    %127 = vector.extract_strided_slice %125 {offsets = [0, 0], sizes = [1, 32], strides = [1, 1]} : vector<1x128xf32> to vector<1x32xf32>
    %128 = vector.extract_strided_slice %125 {offsets = [0, 32], sizes = [1, 32], strides = [1, 1]} : vector<1x128xf32> to vector<1x32xf32>
    %129 = vector.extract_strided_slice %126 {offsets = [0, 64], sizes = [1, 32], strides = [1, 1]} : vector<1x128xf32> to vector<1x32xf32>
    %130 = vector.extract_strided_slice %125 {offsets = [0, 96], sizes = [1, 32], strides = [1, 1]} : vector<1x128xf32> to vector<1x32xf32>
    %131 = arith.mulf %128, %115 : vector<1x32xf32>
    %132 = arith.mulf %127, %129 : vector<1x32xf32>
    %133 = arith.addf %131, %132 : vector<1x32xf32>
    %134 = math.tanh %133 : vector<1x32xf32>
    %135 = arith.mulf %130, %134 : vector<1x32xf32>
    %c7 = arith.constant 7 : index
    %c0_35 = arith.constant 0 : index
    %136 = vector.load %arg6[%c7, %c0_35] : memref<8x128xf32, #tpu.memory_space<vmem>>, vector<1x128xf32>
    %cst_36 = arith.constant dense<0.000000e+00> : vector<1x128xf32>
    %137 = tpu.matmul %135, %7, %cst_36 {dimension_numbers = #tpu.dot_dimension_numbers<[1], [0], [0], [1], [0, 0, 1, 1], [], []>} : vector<1x32xf32>, vector<32x128xf32>, vector<1x128xf32> -> vector<1x128xf32>
    %138 = arith.addf %136, %137 : vector<1x128xf32>
    %139 = arith.negf %138 : vector<1x128xf32>
    %140 = math.exp %139 : vector<1x128xf32>
    %cst_37 = arith.constant 1.000000e+00 : f32
    %141 = vector.broadcast %cst_37 : f32 to vector<1x128xf32>
    %142 = arith.addf %141, %140 : vector<1x128xf32>
    %143 = arith.divf %141, %142 : vector<1x128xf32>
    %144 = math.tanh %138 : vector<1x128xf32>
    %145 = vector.extract_strided_slice %143 {offsets = [0, 0], sizes = [1, 32], strides = [1, 1]} : vector<1x128xf32> to vector<1x32xf32>
    %146 = vector.extract_strided_slice %143 {offsets = [0, 32], sizes = [1, 32], strides = [1, 1]} : vector<1x128xf32> to vector<1x32xf32>
    %147 = vector.extract_strided_slice %144 {offsets = [0, 64], sizes = [1, 32], strides = [1, 1]} : vector<1x128xf32> to vector<1x32xf32>
    %148 = vector.extract_strided_slice %143 {offsets = [0, 96], sizes = [1, 32], strides = [1, 1]} : vector<1x128xf32> to vector<1x32xf32>
    %149 = arith.mulf %146, %133 : vector<1x32xf32>
    %150 = arith.mulf %145, %147 : vector<1x32xf32>
    %151 = arith.addf %149, %150 : vector<1x32xf32>
    %152 = math.tanh %151 : vector<1x32xf32>
    %153 = arith.mulf %148, %152 : vector<1x32xf32>
    %c0_38 = arith.constant 0 : index
    %c0_39 = arith.constant 0 : index
    %154 = vector.load %arg5[%c0_38, %c0_39] : memref<2x32xf32, #tpu.memory_space<vmem>>, vector<1x32xf32>
    tpu.vector_store %arg5[%c0_38, %c0_39], %153 {strides = array<i32>} : memref<2x32xf32, #tpu.memory_space<vmem>>, vector<1x32xf32>,
    %c1_40 = arith.constant 1 : index
    %c0_41 = arith.constant 0 : index
    %155 = vector.load %arg5[%c1_40, %c0_41] : memref<2x32xf32, #tpu.memory_space<vmem>>, vector<1x32xf32>
    tpu.vector_store %arg5[%c1_40, %c0_41], %151 {strides = array<i32>} : memref<2x32xf32, #tpu.memory_space<vmem>>, vector<1x32xf32>,
    return
  }
}

</mosaic_0001>

<llo_original>
// kernel: lstm_encoder_forward.1
$region0: #{lstm_encoder_forward.1}
  #allocation0 [shape = 'u32[]', space=smem, size = 0x4, offset = 0x4, fixed_abs, tag = 'smem constant byte address 0x4 - core index']
  #allocation1 [shape = 'u32[144,128]{1,0:T(1,128)}', space=vmem, size = 0x12000, scoped, tag = 'internal scratch']
  #allocation2 [shape = 'f32[8,128]{1,0:T(8,128)}', space=vmem, size = 0x1000, scoped, tag = 'scratch operand']
  %s0 = inlined_call_operand.vmem [shape: f32[8,16], index: 0, kind: input, shape index: {}]
  %s1 = inlined_call_operand.hbm [shape: f32[16,128], index: 1, kind: input, shape index: {}]
  %s2 = inlined_call_operand.hbm [shape: f32[32,128], index: 2, kind: input, shape index: {}]
  %s3 = inlined_call_operand.vmem [shape: f32[1,128], index: 3, kind: input, shape index: {}]
  %s4 = inlined_call_operand.vmem [shape: f32[2,32], index: 4, kind: input, shape index: {}, may-alias: {4,5}]
  %s5 = inlined_call_operand.vmem [shape: f32[2,32], index: 5, kind: output, shape index: {}, may-alias: {4,5}]
  %s6 = sld [smem:[#allocation0]]
  $region38: #{lstm_encoder_forward.1} parent=0
    _
  %s8 = ssub.s32 1, %s6
  %s9 = scalar_select 0, %s8, %s6
  $region1: #{lstm_encoder_forward.1} parent=0
    #allocation3 [shape = 'u8[8192]{0}', space=vmem, size = 0x2000, scoped, tag = 'input window, operand 1, single buffered']
    #allocation4 [shape = 's32[1]{0}', space=sflag, size = 0x4, scoped, tag = 'scoped memory for lstm_encoder_forward.1']
    #allocation5 [shape = 'u8[16384]{0}', space=vmem, size = 0x4000, scoped, tag = 'input window, operand 2, single buffered']
    #allocation6 [shape = 's32[1]{0}', space=sflag, size = 0x4, scoped, tag = 'scoped memory for lstm_encoder_forward.1']
    %10 = vsyncpa [#allocation4], 0
    %11 = vsyncpa [#allocation6], 0
    // Predicated region
    $region2: #{lstm_encoder_forward.1} parent=1 // pred_check
      _
    $region3: #{lstm_encoder_forward.1} parent=1 // pred_check_branch
      %13 = sbr.rel (0) target = $region5
    $region4: #{lstm_encoder_forward.1} parent=1 // pred_region
      _
    $region5: #{lstm_encoder_forward.1} parent=1 // pred_fallthru
      _
    // Predicated region
    $region6: #{lstm_encoder_forward.1} parent=1 // pred_check
      _
    $region7: #{lstm_encoder_forward.1} parent=1 // pred_check_branch
      %15 = sbr.rel (0) target = $region9
    $region8: #{lstm_encoder_forward.1} parent=1 // pred_region
      %s17 = ssub.s32 256, 256
      %18 = vsyncadd [#allocation4], %s17
      %s19 = sshll.u32 [#allocation3], 4
      %s20 = int_to_ptr.vmem [resolvable:$true] %s19
      %25 = dma.hbm_to_vmem [thread:$0]  %s1, 256, %s20, [#allocation4], 128, 128, 8
    $region9: #{lstm_encoder_forward.1} parent=1 // pred_fallthru
      _
    // Predicated region
    $region10: #{lstm_encoder_forward.1} parent=1 // pred_check
      _
    $region11: #{lstm_encoder_forward.1} parent=1 // pred_check_branch
      %27 = sbr.rel (0) target = $region13
    $region12: #{lstm_encoder_forward.1} parent=1 // pred_region
      %s29 = ssub.s32 512, 512
      %30 = vsyncadd [#allocation6], %s29
      %s31 = sshll.u32 [#allocation5], 4
      %s32 = int_to_ptr.vmem [resolvable:$true] %s31
      %37 = dma.hbm_to_vmem [thread:$0]  %s2, 512, %s32, [#allocation6], 128, 128, 8
    $region13: #{lstm_encoder_forward.1} parent=1 // pred_fallthru
      _
    // Predicated region
    $region14: #{lstm_encoder_forward.1} parent=1 // pred_check
      _
    $region15: #{lstm_encoder_forward.1} parent=1 // pred_check_branch
      %39 = sbr.rel (0) target = $region17
    $region16: #{lstm_encoder_forward.1} parent=1 // pred_region
      _
    $region17: #{lstm_encoder_forward.1} parent=1 // pred_fallthru
      _
    // Predicated region
    $region18: #{lstm_encoder_forward.1} parent=1 // pred_check
      _
    $region19: #{lstm_encoder_forward.1} parent=1 // pred_check_branch
      %41 = sbr.rel (0) target = $region21
    $region20: #{lstm_encoder_forward.1} parent=1 // pred_region
      _
    $region21: #{lstm_encoder_forward.1} parent=1 // pred_fallthru
      _
    // Predicated region
    $region22: #{lstm_encoder_forward.1} parent=1 // pred_check
      _
    $region23: #{lstm_encoder_forward.1} parent=1 // pred_check_branch
      %43 = sbr.rel (0) target = $region25
    $region24: #{lstm_encoder_forward.1} parent=1 // pred_region
      %44 = dma.done [#allocation4], 256
    $region25: #{lstm_encoder_forward.1} parent=1 // pred_fallthru
      _
    // Predicated region
    $region26: #{lstm_encoder_forward.1} parent=1 // pred_check
      _
    $region27: #{lstm_encoder_forward.1} parent=1 // pred_check_branch
      %46 = sbr.rel (0) target = $region29
    $region28: #{lstm_encoder_forward.1} parent=1 // pred_region
      %47 = dma.done [#allocation6], 512
    $region29: #{lstm_encoder_forward.1} parent=1 // pred_fallthru
      _
    %v48 = vld [vmem:[%s0] sm:$0xff]
    %v49 = vld [vmem:[#allocation3] sm:$0xff]
    %v50 = vld [vmem:[#allocation3 + $0x8] sm:$0xff]
    %v51 = vld [vmem:[%s3] sm:$0x1]
    %v53 = vlaneseq
    %v54 = vshrl.u32 %v53, 7
    %v55 = vsub.s32 0, %v54
    %v56 = vrot.slane %v51, %v55
    %vm58 = vcmask 130048
    %v60 = vsel %vm58, %v48, 0
    %62 = vmatprep.subr.mxu0 0.0
    %63 = vmatpush1.msra.mxu0 %v49
    %64 = vmatprep.subr.mxu0 0.0
    %65 = vmatpush1.msra.mxu0 %v50
    %66 = vmatprep.subr.mxu0 0.0
    %67 = vmatpush1.msra.mxu0 0.0
    %68 = vmatprep.subr.mxu0 0.0
    %69 = vmatpush1.msra.mxu0 0.0
    %70 = vmatprep.subr.mxu0 0.0
    %71 = vmatpush1.msra.mxu0 0.0
    %72 = vmatprep.subr.mxu0 0.0
    %73 = vmatpush1.msra.mxu0 0.0
    %74 = vmatprep.subr.mxu0 0.0
    %75 = vmatpush1.msra.mxu0 0.0
    %76 = vmatprep.subr.mxu0 0.0
    %77 = vmatpush1.msra.mxu0 0.0
    %78 = vmatprep.subr.mxu0 0.0
    %79 = vmatpush1.msra.mxu0 0.0
    %80 = vmatprep.subr.mxu0 0.0
    %81 = vmatpush1.msra.mxu0 0.0
    %82 = vmatprep.subr.mxu0 0.0
    %83 = vmatpush1.msra.mxu0 0.0
    %84 = vmatprep.subr.mxu0 0.0
    %85 = vmatpush1.msra.mxu0 0.0
    %86 = vmatprep.subr.mxu0 0.0
    %87 = vmatpush1.msra.mxu0 0.0
    %88 = vmatprep.subr.mxu0 0.0
    %89 = vmatpush1.msra.mxu0 0.0
    %90 = vmatprep.subr.mxu0 0.0
    %91 = vmatpush1.msra.mxu0 0.0
    %92 = vmatprep.subr.mxu0 0.0
    %93 = vmatpush1.msra.mxu0 0.0
    %94 = vmatprep.subr.mxu0 0.0
    %95 = vmatpush1.msra.mxu0 0.0
    %96 = vmatprep.subr.mxu0 0.0
    %97 = vmatpush1.msra.mxu0 0.0
    %98 = vmatprep.subr.mxu0 0.0
    %99 = vmatpush1.msra.mxu0 0.0
    %100 = vmatprep.subr.mxu0 0.0
    %101 = vmatpush1.msra.mxu0 0.0
    %102 = vmatprep.subr.mxu0 0.0
    %103 = vmatpush1.msra.mxu0 0.0
    %104 = vmatprep.subr.mxu0 0.0
    %105 = vmatpush1.msra.mxu0 0.0
    %106 = vmatprep.subr.mxu0 0.0
    %107 = vmatpush1.msra.mxu0 0.0
    %108 = vmatprep.subr.mxu0 0.0
    %109 = vmatpush1.msra.mxu0 0.0
    %110 = vmatprep.subr.mxu0 0.0
    %111 = vmatpush1.msra.mxu0 0.0
    %112 = vmatprep.subr.mxu0 0.0
    %113 = vmatpush1.msra.mxu0 0.0
    %114 = vmatprep.subr.mxu0 0.0
    %115 = vmatpush1.msra.mxu0 0.0
    %116 = vmatprep.subr.mxu0 0.0
    %117 = vmatpush1.msra.mxu0 0.0
    %118 = vmatprep.subr.mxu0 0.0
    %119 = vmatpush1.msra.mxu0 0.0
    %120 = vmatprep.subr.mxu0 0.0
    %121 = vmatpush1.msra.mxu0 0.0
    %122 = vmatprep.subr.mxu0 0.0
    %123 = vmatpush1.msra.mxu0 0.0
    %124 = vmatprep.subr.mxu0 0.0
    %125 = vmatpush1.msra.mxu0 0.0
    %126 = vmatprep.mubr.f32.mxu0 0.0
    %127 = vmatmul.mubr.f32.gmra.mrb[0].mxu0 %v60
    %v128 = vpop.f32.mrb[0].mxu0
    %v129 = vadd.f32 %v56, %v128
    %v130 = vpop.f32.mrb[0].mxu0
    %131 = vdwg.mxu0
    %132 = vst [vmem:[#allocation2] sm:$0xff] %v129
    %v133 = vld [vmem:[#allocation5] sm:$0xff]
    %v134 = vld [vmem:[#allocation5 + $0x8] sm:$0xff]
    %v135 = vld [vmem:[#allocation5 + $0x10] sm:$0xff]
    %v136 = vld [vmem:[#allocation5 + $0x18] sm:$0xff]
    %v137 = vld [vmem:[%s4] sm:$0x1]
    %v138 = vld [vmem:[%s4 + $0x1] sm:$0x1]
    %v139 = vld [vmem:[#allocation2] sm:$0x1]
    %vm140 = vcmask 261120
    %v142 = vsel %vm140, %v137, 0
    %144 = vmatprep.subr.mxu0 0.0
    %145 = vmatpush1.msra.mxu0 %v133
    %146 = vmatprep.subr.mxu0 0.0
    %147 = vmatpush1.msra.mxu0 %v134
    %148 = vmatprep.subr.mxu0 0.0
    %149 = vmatpush1.msra.mxu0 %v135
    %150 = vmatprep.subr.mxu0 0.0
    %151 = vmatpush1.msra.mxu0 %v136
    %152 = vmatprep.subr.mxu0 0.0
    %153 = vmatpush1.msra.mxu0 0.0
    %154 = vmatprep.subr.mxu0 0.0
    %155 = vmatpush1.msra.mxu0 0.0
    %156 = vmatprep.subr.mxu0 0.0
    %157 = vmatpush1.msra.mxu0 0.0
    %158 = vmatprep.subr.mxu0 0.0
    %159 = vmatpush1.msra.mxu0 0.0
    %160 = vmatprep.subr.mxu0 0.0
    %161 = vmatpush1.msra.mxu0 0.0
    %162 = vmatprep.subr.mxu0 0.0
    %163 = vmatpush1.msra.mxu0 0.0
    %164 = vmatprep.subr.mxu0 0.0
    %165 = vmatpush1.msra.mxu0 0.0
    %166 = vmatprep.subr.mxu0 0.0
    %167 = vmatpush1.msra.mxu0 0.0
    %168 = vmatprep.subr.mxu0 0.0
    %169 = vmatpush1.msra.mxu0 0.0
    %170 = vmatprep.subr.mxu0 0.0
    %171 = vmatpush1.msra.mxu0 0.0
    %172 = vmatprep.subr.mxu0 0.0
    %173 = vmatpush1.msra.mxu0 0.0
    %174 = vmatprep.subr.mxu0 0.0
    %175 = vmatpush1.msra.mxu0 0.0
    %176 = vmatprep.subr.mxu0 0.0
    %177 = vmatpush1.msra.mxu0 0.0
    %178 = vmatprep.subr.mxu0 0.0
    %179 = vmatpush1.msra.mxu0 0.0
    %180 = vmatprep.subr.mxu0 0.0
    %181 = vmatpush1.msra.mxu0 0.0
    %182 = vmatprep.subr.mxu0 0.0
    %183 = vmatpush1.msra.mxu0 0.0
    %184 = vmatprep.subr.mxu0 0.0
    %185 = vmatpush1.msra.mxu0 0.0
    %186 = vmatprep.subr.mxu0 0.0
    %187 = vmatpush1.msra.mxu0 0.0
    %188 = vmatprep.subr.mxu0 0.0
    %189 = vmatpush1.msra.mxu0 0.0
    %190 = vmatprep.subr.mxu0 0.0
    %191 = vmatpush1.msra.mxu0 0.0
    %192 = vmatprep.subr.mxu0 0.0
    %193 = vmatpush1.msra.mxu0 0.0
    %194 = vmatprep.subr.mxu0 0.0
    %195 = vmatpush1.msra.mxu0 0.0
    %196 = vmatprep.subr.mxu0 0.0
    %197 = vmatpush1.msra.mxu0 0.0
    %198 = vmatprep.subr.mxu0 0.0
    %199 = vmatpush1.msra.mxu0 0.0
    %200 = vmatprep.subr.mxu0 0.0
    %201 = vmatpush1.msra.mxu0 0.0
    %202 = vmatprep.subr.mxu0 0.0
    %203 = vmatpush1.msra.mxu0 0.0
    %204 = vmatprep.subr.mxu0 0.0
    %205 = vmatpush1.msra.mxu0 0.0
    %206 = vmatprep.subr.mxu0 0.0
    %207 = vmatpush1.msra.mxu0 0.0
    %208 = vmatprep.mubr.f32.mxu0 0.0
    %209 = vmatmul.mubr.f32.gmra.mrb[0].mxu0 %v142
    %v210 = vpop.f32.mrb[0].mxu0
    %v211 = vadd.f32 0.0, %v210
    %v212 = vpop.f32.mrb[0].mxu0
    %213 = vdwg.mxu0
    %v214 = vadd.f32 %v139, %v211
    %v215 = vxor.u32 %v214, 2147483648
    %v216 = vmul.f32 %v215, 1.442695
    %v217 = vpow.pop %v216
    %v218 = vadd.f32 %v217, 1.0
    %v219 = vrcp.pop %v218
    %v220 = vmul.f32 1.0, %v219
    %v221 = vtanh.pop %v214
    %223 = vrot.lane.b32.xlu0 %v138, 32
    %v224 = vpop.permute.xlu0 %223
    %v226 = vmul.f32 %v220, %v224
    %228 = vrot.lane.b32.xlu0 %v221, 64
    %v229 = vpop.permute.xlu0 %228
    %v231 = vmul.f32 %v220, %v229
    %233 = vrot.lane.b32.xlu0 %v231, 32
    %v234 = vpop.permute.xlu0 %233
    %v236 = vadd.f32 %v226, %v234
    %v237 = vtanh.pop %v236
    %239 = vrot.lane.b32.xlu0 %v237, 64
    %v240 = vpop.permute.xlu0 %239
    %v242 = vmul.f32 %v220, %v240
    %v243 = vld [vmem:[#allocation2 + $0x1] sm:$0x1]
    %245 = vrot.lane.b32.xlu0 %v242, 32
    %v246 = vpop.permute.xlu0 %245
    %v247 = vsel %vm140, %v246, 0
    %249 = vmatprep.subr.mxu0 0.0
    %250 = vmatpush1.msra.mxu0 %v133
    %251 = vmatprep.subr.mxu0 0.0
    %252 = vmatpush1.msra.mxu0 %v134
    %253 = vmatprep.subr.mxu0 0.0
    %254 = vmatpush1.msra.mxu0 %v135
    %255 = vmatprep.subr.mxu0 0.0
    %256 = vmatpush1.msra.mxu0 %v136
    %257 = vmatprep.subr.mxu0 0.0
    %258 = vmatpush1.msra.mxu0 0.0
    %259 = vmatprep.subr.mxu0 0.0
    %260 = vmatpush1.msra.mxu0 0.0
    %261 = vmatprep.subr.mxu0 0.0
    %262 = vmatpush1.msra.mxu0 0.0
    %263 = vmatprep.subr.mxu0 0.0
    %264 = vmatpush1.msra.mxu0 0.0
    %265 = vmatprep.subr.mxu0 0.0
    %266 = vmatpush1.msra.mxu0 0.0
    %267 = vmatprep.subr.mxu0 0.0
    %268 = vmatpush1.msra.mxu0 0.0
    %269 = vmatprep.subr.mxu0 0.0
    %270 = vmatpush1.msra.mxu0 0.0
    %271 = vmatprep.subr.mxu0 0.0
    %272 = vmatpush1.msra.mxu0 0.0
    %273 = vmatprep.subr.mxu0 0.0
    %274 = vmatpush1.msra.mxu0 0.0
    %275 = vmatprep.subr.mxu0 0.0
    %276 = vmatpush1.msra.mxu0 0.0
    %277 = vmatprep.subr.mxu0 0.0
    %278 = vmatpush1.msra.mxu0 0.0
    %279 = vmatprep.subr.mxu0 0.0
    %280 = vmatpush1.msra.mxu0 0.0
    %281 = vmatprep.subr.mxu0 0.0
    %282 = vmatpush1.msra.mxu0 0.0
    %283 = vmatprep.subr.mxu0 0.0
    %284 = vmatpush1.msra.mxu0 0.0
    %285 = vmatprep.subr.mxu0 0.0
    %286 = vmatpush1.msra.mxu0 0.0
    %287 = vmatprep.subr.mxu0 0.0
    %288 = vmatpush1.msra.mxu0 0.0
    %289 = vmatprep.subr.mxu0 0.0
    %290 = vmatpush1.msra.mxu0 0.0
    %291 = vmatprep.subr.mxu0 0.0
    %292 = vmatpush1.msra.mxu0 0.0
    %293 = vmatprep.subr.mxu0 0.0
    %294 = vmatpush1.msra.mxu0 0.0
    %295 = vmatprep.subr.mxu0 0.0
    %296 = vmatpush1.msra.mxu0 0.0
    %297 = vmatprep.subr.mxu0 0.0
    %298 = vmatpush1.msra.mxu0 0.0
    %299 = vmatprep.subr.mxu0 0.0
    %300 = vmatpush1.msra.mxu0 0.0
    %301 = vmatprep.subr.mxu0 0.0
    %302 = vmatpush1.msra.mxu0 0.0
    %303 = vmatprep.subr.mxu0 0.0
    %304 = vmatpush1.msra.mxu0 0.0
    %305 = vmatprep.subr.mxu0 0.0
    %306 = vmatpush1.msra.mxu0 0.0
    %307 = vmatprep.subr.mxu0 0.0
    %308 = vmatpush1.msra.mxu0 0.0
    %309 = vmatprep.subr.mxu0 0.0
    %310 = vmatpush1.msra.mxu0 0.0
    %311 = vmatprep.subr.mxu0 0.0
    %312 = vmatpush1.msra.mxu0 0.0
    %313 = vmatprep.mubr.f32.mxu0 0.0
    %314 = vmatmul.mubr.f32.gmra.mrb[0].mxu0 %v247
    %v315 = vpop.f32.mrb[0].mxu0
    %v316 = vadd.f32 0.0, %v315
    %v317 = vpop.f32.mrb[0].mxu0
    %318 = vdwg.mxu0
    %v319 = vadd.f32 %v243, %v316
    %v320 = vxor.u32 %v319, 2147483648
    %v321 = vmul.f32 %v320, 1.442695
    %v322 = vpow.pop %v321
    %v323 = vadd.f32 %v322, 1.0
    %v324 = vrcp.pop %v323
    %v325 = vmul.f32 1.0, %v324
    %v326 = vtanh.pop %v319
    %v327 = vmul.f32 %v325, %v236
    %329 = vrot.lane.b32.xlu0 %v326, 64
    %v330 = vpop.permute.xlu0 %329
    %v332 = vmul.f32 %v325, %v330
    %334 = vrot.lane.b32.xlu0 %v332, 32
    %v335 = vpop.permute.xlu0 %334
    %v337 = vadd.f32 %v327, %v335
    %v338 = vtanh.pop %v337
    %340 = vrot.lane.b32.xlu0 %v338, 64
    %v341 = vpop.permute.xlu0 %340
    %v343 = vmul.f32 %v325, %v341
    %v344 = vld [vmem:[#allocation2 + $0x2] sm:$0x1]
    %346 = vrot.lane.b32.xlu0 %v343, 32
    %v347 = vpop.permute.xlu0 %346
    %v348 = vsel %vm140, %v347, 0
    %350 = vmatprep.subr.mxu0 0.0
    %351 = vmatpush1.msra.mxu0 %v133
    %352 = vmatprep.subr.mxu0 0.0
    %353 = vmatpush1.msra.mxu0 %v134
    %354 = vmatprep.subr.mxu0 0.0
    %355 = vmatpush1.msra.mxu0 %v135
    %356 = vmatprep.subr.mxu0 0.0
    %357 = vmatpush1.msra.mxu0 %v136
    %358 = vmatprep.subr.mxu0 0.0
    %359 = vmatpush1.msra.mxu0 0.0
    %360 = vmatprep.subr.mxu0 0.0
    %361 = vmatpush1.msra.mxu0 0.0
    %362 = vmatprep.subr.mxu0 0.0
    %363 = vmatpush1.msra.mxu0 0.0
    %364 = vmatprep.subr.mxu0 0.0
    %365 = vmatpush1.msra.mxu0 0.0
    %366 = vmatprep.subr.mxu0 0.0
    %367 = vmatpush1.msra.mxu0 0.0
    %368 = vmatprep.subr.mxu0 0.0
    %369 = vmatpush1.msra.mxu0 0.0
    %370 = vmatprep.subr.mxu0 0.0
    %371 = vmatpush1.msra.mxu0 0.0
    %372 = vmatprep.subr.mxu0 0.0
    %373 = vmatpush1.msra.mxu0 0.0
    %374 = vmatprep.subr.mxu0 0.0
    %375 = vmatpush1.msra.mxu0 0.0
    %376 = vmatprep.subr.mxu0 0.0
    %377 = vmatpush1.msra.mxu0 0.0
    %378 = vmatprep.subr.mxu0 0.0
    %379 = vmatpush1.msra.mxu0 0.0
    %380 = vmatprep.subr.mxu0 0.0
    %381 = vmatpush1.msra.mxu0 0.0
    %382 = vmatprep.subr.mxu0 0.0
    %383 = vmatpush1.msra.mxu0 0.0
    %384 = vmatprep.subr.mxu0 0.0
    %385 = vmatpush1.msra.mxu0 0.0
    %386 = vmatprep.subr.mxu0 0.0
    %387 = vmatpush1.msra.mxu0 0.0
    %388 = vmatprep.subr.mxu0 0.0
    %389 = vmatpush1.msra.mxu0 0.0
    %390 = vmatprep.subr.mxu0 0.0
    %391 = vmatpush1.msra.mxu0 0.0
    %392 = vmatprep.subr.mxu0 0.0
    %393 = vmatpush1.msra.mxu0 0.0
    %394 = vmatprep.subr.mxu0 0.0
    %395 = vmatpush1.msra.mxu0 0.0
    %396 = vmatprep.subr.mxu0 0.0
    %397 = vmatpush1.msra.mxu0 0.0
    %398 = vmatprep.subr.mxu0 0.0
    %399 = vmatpush1.msra.mxu0 0.0
    %400 = vmatprep.subr.mxu0 0.0
    %401 = vmatpush1.msra.mxu0 0.0
    %402 = vmatprep.subr.mxu0 0.0
    %403 = vmatpush1.msra.mxu0 0.0
    %404 = vmatprep.subr.mxu0 0.0
    %405 = vmatpush1.msra.mxu0 0.0
    %406 = vmatprep.subr.mxu0 0.0
    %407 = vmatpush1.msra.mxu0 0.0
    %408 = vmatprep.subr.mxu0 0.0
    %409 = vmatpush1.msra.mxu0 0.0
    %410 = vmatprep.subr.mxu0 0.0
    %411 = vmatpush1.msra.mxu0 0.0
    %412 = vmatprep.subr.mxu0 0.0
    %413 = vmatpush1.msra.mxu0 0.0
    %414 = vmatprep.mubr.f32.mxu0 0.0
    %415 = vmatmul.mubr.f32.gmra.mrb[0].mxu0 %v348
    %v416 = vpop.f32.mrb[0].mxu0
    %v417 = vadd.f32 0.0, %v416
    %v418 = vpop.f32.mrb[0].mxu0
    %419 = vdwg.mxu0
    %v420 = vadd.f32 %v344, %v417
    %v421 = vxor.u32 %v420, 2147483648
    %v422 = vmul.f32 %v421, 1.442695
    %v423 = vpow.pop %v422
    %v424 = vadd.f32 %v423, 1.0
    %v425 = vrcp.pop %v424
    %v426 = vmul.f32 1.0, %v425
    %v427 = vtanh.pop %v420
    %v428 = vmul.f32 %v426, %v337
    %430 = vrot.lane.b32.xlu0 %v427, 64
    %v431 = vpop.permute.xlu0 %430
    %v433 = vmul.f32 %v426, %v431
    %435 = vrot.lane.b32.xlu0 %v433, 32
    %v436 = vpop.permute.xlu0 %435
    %v438 = vadd.f32 %v428, %v436
    %v439 = vtanh.pop %v438
    %441 = vrot.lane.b32.xlu0 %v439, 64
    %v442 = vpop.permute.xlu0 %441
    %v444 = vmul.f32 %v426, %v442
    %v445 = vld [vmem:[#allocation2 + $0x3] sm:$0x1]
    %447 = vrot.lane.b32.xlu0 %v444, 32
    %v448 = vpop.permute.xlu0 %447
    %v449 = vsel %vm140, %v448, 0
    %451 = vmatprep.subr.mxu0 0.0
    %452 = vmatpush1.msra.mxu0 %v133
    %453 = vmatprep.subr.mxu0 0.0
    %454 = vmatpush1.msra.mxu0 %v134
    %455 = vmatprep.subr.mxu0 0.0
    %456 = vmatpush1.msra.mxu0 %v135
    %457 = vmatprep.subr.mxu0 0.0
    %458 = vmatpush1.msra.mxu0 %v136
    %459 = vmatprep.subr.mxu0 0.0
    %460 = vmatpush1.msra.mxu0 0.0
    %461 = vmatprep.subr.mxu0 0.0
    %462 = vmatpush1.msra.mxu0 0.0
    %463 = vmatprep.subr.mxu0 0.0
    %464 = vmatpush1.msra.mxu0 0.0
    %465 = vmatprep.subr.mxu0 0.0
    %466 = vmatpush1.msra.mxu0 0.0
    %467 = vmatprep.subr.mxu0 0.0
    %468 = vmatpush1.msra.mxu0 0.0
    %469 = vmatprep.subr.mxu0 0.0
    %470 = vmatpush1.msra.mxu0 0.0
    %471 = vmatprep.subr.mxu0 0.0
    %472 = vmatpush1.msra.mxu0 0.0
    %473 = vmatprep.subr.mxu0 0.0
    %474 = vmatpush1.msra.mxu0 0.0
    %475 = vmatprep.subr.mxu0 0.0
    %476 = vmatpush1.msra.mxu0 0.0
    %477 = vmatprep.subr.mxu0 0.0
    %478 = vmatpush1.msra.mxu0 0.0
    %479 = vmatprep.subr.mxu0 0.0
    %480 = vmatpush1.msra.mxu0 0.0
    %481 = vmatprep.subr.mxu0 0.0
    %482 = vmatpush1.msra.mxu0 0.0
    %483 = vmatprep.subr.mxu0 0.0
    %484 = vmatpush1.msra.mxu0 0.0
    %485 = vmatprep.subr.mxu0 0.0
    %486 = vmatpush1.msra.mxu0 0.0
    %487 = vmatprep.subr.mxu0 0.0
    %488 = vmatpush1.msra.mxu0 0.0
    %489 = vmatprep.subr.mxu0 0.0
    %490 = vmatpush1.msra.mxu0 0.0
    %491 = vmatprep.subr.mxu0 0.0
    %492 = vmatpush1.msra.mxu0 0.0
    %493 = vmatprep.subr.mxu0 0.0
    %494 = vmatpush1.msra.mxu0 0.0
    %495 = vmatprep.subr.mxu0 0.0
    %496 = vmatpush1.msra.mxu0 0.0
    %497 = vmatprep.subr.mxu0 0.0
    %498 = vmatpush1.msra.mxu0 0.0
    %499 = vmatprep.subr.mxu0 0.0
    %500 = vmatpush1.msra.mxu0 0.0
    %501 = vmatprep.subr.mxu0 0.0
    %502 = vmatpush1.msra.mxu0 0.0
    %503 = vmatprep.subr.mxu0 0.0
    %504 = vmatpush1.msra.mxu0 0.0
    %505 = vmatprep.subr.mxu0 0.0
    %506 = vmatpush1.msra.mxu0 0.0
    %507 = vmatprep.subr.mxu0 0.0
    %508 = vmatpush1.msra.mxu0 0.0
    %509 = vmatprep.subr.mxu0 0.0
    %510 = vmatpush1.msra.mxu0 0.0
    %511 = vmatprep.subr.mxu0 0.0
    %512 = vmatpush1.msra.mxu0 0.0
    %513 = vmatprep.subr.mxu0 0.0
    %514 = vmatpush1.msra.mxu0 0.0
    %515 = vmatprep.mubr.f32.mxu0 0.0
    %516 = vmatmul.mubr.f32.gmra.mrb[0].mxu0 %v449
    %v517 = vpop.f32.mrb[0].mxu0
    %v518 = vadd.f32 0.0, %v517
    %v519 = vpop.f32.mrb[0].mxu0
    %520 = vdwg.mxu0
    %v521 = vadd.f32 %v445, %v518
    %v522 = vxor.u32 %v521, 2147483648
    %v523 = vmul.f32 %v522, 1.442695
    %v524 = vpow.pop %v523
    %v525 = vadd.f32 %v524, 1.0
    %v526 = vrcp.pop %v525
    %v527 = vmul.f32 1.0, %v526
    %v528 = vtanh.pop %v521
    %v529 = vmul.f32 %v527, %v438
    %531 = vrot.lane.b32.xlu0 %v528, 64
    %v532 = vpop.permute.xlu0 %531
    %v534 = vmul.f32 %v527, %v532
    %536 = vrot.lane.b32.xlu0 %v534, 32
    %v537 = vpop.permute.xlu0 %536
    %v539 = vadd.f32 %v529, %v537
    %v540 = vtanh.pop %v539
    %542 = vrot.lane.b32.xlu0 %v540, 64
    %v543 = vpop.permute.xlu0 %542
    %v545 = vmul.f32 %v527, %v543
    %v546 = vld [vmem:[#allocation2 + $0x4] sm:$0x1]
    %548 = vrot.lane.b32.xlu0 %v545, 32
    %v549 = vpop.permute.xlu0 %548
    %v550 = vsel %vm140, %v549, 0
    %552 = vmatprep.subr.mxu0 0.0
    %553 = vmatpush1.msra.mxu0 %v133
    %554 = vmatprep.subr.mxu0 0.0
    %555 = vmatpush1.msra.mxu0 %v134
    %556 = vmatprep.subr.mxu0 0.0
    %557 = vmatpush1.msra.mxu0 %v135
    %558 = vmatprep.subr.mxu0 0.0
    %559 = vmatpush1.msra.mxu0 %v136
    %560 = vmatprep.subr.mxu0 0.0
    %561 = vmatpush1.msra.mxu0 0.0
    %562 = vmatprep.subr.mxu0 0.0
    %563 = vmatpush1.msra.mxu0 0.0
    %564 = vmatprep.subr.mxu0 0.0
    %565 = vmatpush1.msra.mxu0 0.0
    %566 = vmatprep.subr.mxu0 0.0
    %567 = vmatpush1.msra.mxu0 0.0
    %568 = vmatprep.subr.mxu0 0.0
    %569 = vmatpush1.msra.mxu0 0.0
    %570 = vmatprep.subr.mxu0 0.0
    %571 = vmatpush1.msra.mxu0 0.0
    %572 = vmatprep.subr.mxu0 0.0
    %573 = vmatpush1.msra.mxu0 0.0
    %574 = vmatprep.subr.mxu0 0.0
    %575 = vmatpush1.msra.mxu0 0.0
    %576 = vmatprep.subr.mxu0 0.0
    %577 = vmatpush1.msra.mxu0 0.0
    %578 = vmatprep.subr.mxu0 0.0
    %579 = vmatpush1.msra.mxu0 0.0
    %580 = vmatprep.subr.mxu0 0.0
    %581 = vmatpush1.msra.mxu0 0.0
    %582 = vmatprep.subr.mxu0 0.0
    %583 = vmatpush1.msra.mxu0 0.0
    %584 = vmatprep.subr.mxu0 0.0
    %585 = vmatpush1.msra.mxu0 0.0
    %586 = vmatprep.subr.mxu0 0.0
    %587 = vmatpush1.msra.mxu0 0.0
    %588 = vmatprep.subr.mxu0 0.0
    %589 = vmatpush1.msra.mxu0 0.0
    %590 = vmatprep.subr.mxu0 0.0
    %591 = vmatpush1.msra.mxu0 0.0
    %592 = vmatprep.subr.mxu0 0.0
    %593 = vmatpush1.msra.mxu0 0.0
    %594 = vmatprep.subr.mxu0 0.0
    %595 = vmatpush1.msra.mxu0 0.0
    %596 = vmatprep.subr.mxu0 0.0
    %597 = vmatpush1.msra.mxu0 0.0
    %598 = vmatprep.subr.mxu0 0.0
    %599 = vmatpush1.msra.mxu0 0.0
    %600 = vmatprep.subr.mxu0 0.0
    %601 = vmatpush1.msra.mxu0 0.0
    %602 = vmatprep.subr.mxu0 0.0
    %603 = vmatpush1.msra.mxu0 0.0
    %604 = vmatprep.subr.mxu0 0.0
    %605 = vmatpush1.msra.mxu0 0.0
    %606 = vmatprep.subr.mxu0 0.0
    %607 = vmatpush1.msra.mxu0 0.0
    %608 = vmatprep.subr.mxu0 0.0
    %609 = vmatpush1.msra.mxu0 0.0
    %610 = vmatprep.subr.mxu0 0.0
    %611 = vmatpush1.msra.mxu0 0.0
    %612 = vmatprep.subr.mxu0 0.0
    %613 = vmatpush1.msra.mxu0 0.0
    %614 = vmatprep.subr.mxu0 0.0
    %615 = vmatpush1.msra.mxu0 0.0
    %616 = vmatprep.mubr.f32.mxu0 0.0
    %617 = vmatmul.mubr.f32.gmra.mrb[0].mxu0 %v550
    %v618 = vpop.f32.mrb[0].mxu0
    %v619 = vadd.f32 0.0, %v618
    %v620 = vpop.f32.mrb[0].mxu0
    %621 = vdwg.mxu0
    %v622 = vadd.f32 %v546, %v619
    %v623 = vxor.u32 %v622, 2147483648
    %v624 = vmul.f32 %v623, 1.442695
    %v625 = vpow.pop %v624
    %v626 = vadd.f32 %v625, 1.0
    %v627 = vrcp.pop %v626
    %v628 = vmul.f32 1.0, %v627
    %v629 = vtanh.pop %v622
    %v630 = vmul.f32 %v628, %v539
    %632 = vrot.lane.b32.xlu0 %v629, 64
    %v633 = vpop.permute.xlu0 %632
    %v635 = vmul.f32 %v628, %v633
    %637 = vrot.lane.b32.xlu0 %v635, 32
    %v638 = vpop.permute.xlu0 %637
    %v640 = vadd.f32 %v630, %v638
    %v641 = vtanh.pop %v640
    %643 = vrot.lane.b32.xlu0 %v641, 64
    %v644 = vpop.permute.xlu0 %643
    %v646 = vmul.f32 %v628, %v644
    %v647 = vld [vmem:[#allocation2 + $0x5] sm:$0x1]
    %649 = vrot.lane.b32.xlu0 %v646, 32
    %v650 = vpop.permute.xlu0 %649
    %v651 = vsel %vm140, %v650, 0
    %653 = vmatprep.subr.mxu0 0.0
    %654 = vmatpush1.msra.mxu0 %v133
    %655 = vmatprep.subr.mxu0 0.0
    %656 = vmatpush1.msra.mxu0 %v134
    %657 = vmatprep.subr.mxu0 0.0
    %658 = vmatpush1.msra.mxu0 %v135
    %659 = vmatprep.subr.mxu0 0.0
    %660 = vmatpush1.msra.mxu0 %v136
    %661 = vmatprep.subr.mxu0 0.0
    %662 = vmatpush1.msra.mxu0 0.0
    %663 = vmatprep.subr.mxu0 0.0
    %664 = vmatpush1.msra.mxu0 0.0
    %665 = vmatprep.subr.mxu0 0.0
    %666 = vmatpush1.msra.mxu0 0.0
    %667 = vmatprep.subr.mxu0 0.0
    %668 = vmatpush1.msra.mxu0 0.0
    %669 = vmatprep.subr.mxu0 0.0
    %670 = vmatpush1.msra.mxu0 0.0
    %671 = vmatprep.subr.mxu0 0.0
    %672 = vmatpush1.msra.mxu0 0.0
    %673 = vmatprep.subr.mxu0 0.0
    %674 = vmatpush1.msra.mxu0 0.0
    %675 = vmatprep.subr.mxu0 0.0
    %676 = vmatpush1.msra.mxu0 0.0
    %677 = vmatprep.subr.mxu0 0.0
    %678 = vmatpush1.msra.mxu0 0.0
    %679 = vmatprep.subr.mxu0 0.0
    %680 = vmatpush1.msra.mxu0 0.0
    %681 = vmatprep.subr.mxu0 0.0
    %682 = vmatpush1.msra.mxu0 0.0
    %683 = vmatprep.subr.mxu0 0.0
    %684 = vmatpush1.msra.mxu0 0.0
    %685 = vmatprep.subr.mxu0 0.0
    %686 = vmatpush1.msra.mxu0 0.0
    %687 = vmatprep.subr.mxu0 0.0
    %688 = vmatpush1.msra.mxu0 0.0
    %689 = vmatprep.subr.mxu0 0.0
    %690 = vmatpush1.msra.mxu0 0.0
    %691 = vmatprep.subr.mxu0 0.0
    %692 = vmatpush1.msra.mxu0 0.0
    %693 = vmatprep.subr.mxu0 0.0
    %694 = vmatpush1.msra.mxu0 0.0
    %695 = vmatprep.subr.mxu0 0.0
    %696 = vmatpush1.msra.mxu0 0.0
    %697 = vmatprep.subr.mxu0 0.0
    %698 = vmatpush1.msra.mxu0 0.0
    %699 = vmatprep.subr.mxu0 0.0
    %700 = vmatpush1.msra.mxu0 0.0
    %701 = vmatprep.subr.mxu0 0.0
    %702 = vmatpush1.msra.mxu0 0.0
    %703 = vmatprep.subr.mxu0 0.0
    %704 = vmatpush1.msra.mxu0 0.0
    %705 = vmatprep.subr.mxu0 0.0
    %706 = vmatpush1.msra.mxu0 0.0
    %707 = vmatprep.subr.mxu0 0.0
    %708 = vmatpush1.msra.mxu0 0.0
    %709 = vmatprep.subr.mxu0 0.0
    %710 = vmatpush1.msra.mxu0 0.0
    %711 = vmatprep.subr.mxu0 0.0
    %712 = vmatpush1.msra.mxu0 0.0
    %713 = vmatprep.subr.mxu0 0.0
    %714 = vmatpush1.msra.mxu0 0.0
    %715 = vmatprep.subr.mxu0 0.0
    %716 = vmatpush1.msra.mxu0 0.0
    %717 = vmatprep.mubr.f32.mxu0 0.0
    %718 = vmatmul.mubr.f32.gmra.mrb[0].mxu0 %v651
    %v719 = vpop.f32.mrb[0].mxu0
    %v720 = vadd.f32 0.0, %v719
    %v721 = vpop.f32.mrb[0].mxu0
    %722 = vdwg.mxu0
    %v723 = vadd.f32 %v647, %v720
    %v724 = vxor.u32 %v723, 2147483648
    %v725 = vmul.f32 %v724, 1.442695
    %v726 = vpow.pop %v725
    %v727 = vadd.f32 %v726, 1.0
    %v728 = vrcp.pop %v727
    %v729 = vmul.f32 1.0, %v728
    %v730 = vtanh.pop %v723
    %v731 = vmul.f32 %v729, %v640
    %733 = vrot.lane.b32.xlu0 %v730, 64
    %v734 = vpop.permute.xlu0 %733
    %v736 = vmul.f32 %v729, %v734
    %738 = vrot.lane.b32.xlu0 %v736, 32
    %v739 = vpop.permute.xlu0 %738
    %v741 = vadd.f32 %v731, %v739
    %v742 = vtanh.pop %v741
    %744 = vrot.lane.b32.xlu0 %v742, 64
    %v745 = vpop.permute.xlu0 %744
    %v747 = vmul.f32 %v729, %v745
    %v748 = vld [vmem:[#allocation2 + $0x6] sm:$0x1]
    %750 = vrot.lane.b32.xlu0 %v747, 32
    %v751 = vpop.permute.xlu0 %750
    %v752 = vsel %vm140, %v751, 0
    %754 = vmatprep.subr.mxu0 0.0
    %755 = vmatpush1.msra.mxu0 %v133
    %756 = vmatprep.subr.mxu0 0.0
    %757 = vmatpush1.msra.mxu0 %v134
    %758 = vmatprep.subr.mxu0 0.0
    %759 = vmatpush1.msra.mxu0 %v135
    %760 = vmatprep.subr.mxu0 0.0
    %761 = vmatpush1.msra.mxu0 %v136
    %762 = vmatprep.subr.mxu0 0.0
    %763 = vmatpush1.msra.mxu0 0.0
    %764 = vmatprep.subr.mxu0 0.0
    %765 = vmatpush1.msra.mxu0 0.0
    %766 = vmatprep.subr.mxu0 0.0
    %767 = vmatpush1.msra.mxu0 0.0
    %768 = vmatprep.subr.mxu0 0.0
    %769 = vmatpush1.msra.mxu0 0.0
    %770 = vmatprep.subr.mxu0 0.0
    %771 = vmatpush1.msra.mxu0 0.0
    %772 = vmatprep.subr.mxu0 0.0
    %773 = vmatpush1.msra.mxu0 0.0
    %774 = vmatprep.subr.mxu0 0.0
    %775 = vmatpush1.msra.mxu0 0.0
    %776 = vmatprep.subr.mxu0 0.0
    %777 = vmatpush1.msra.mxu0 0.0
    %778 = vmatprep.subr.mxu0 0.0
    %779 = vmatpush1.msra.mxu0 0.0
    %780 = vmatprep.subr.mxu0 0.0
    %781 = vmatpush1.msra.mxu0 0.0
    %782 = vmatprep.subr.mxu0 0.0
    %783 = vmatpush1.msra.mxu0 0.0
    %784 = vmatprep.subr.mxu0 0.0
    %785 = vmatpush1.msra.mxu0 0.0
    %786 = vmatprep.subr.mxu0 0.0
    %787 = vmatpush1.msra.mxu0 0.0
    %788 = vmatprep.subr.mxu0 0.0
    %789 = vmatpush1.msra.mxu0 0.0
    %790 = vmatprep.subr.mxu0 0.0
    %791 = vmatpush1.msra.mxu0 0.0
    %792 = vmatprep.subr.mxu0 0.0
    %793 = vmatpush1.msra.mxu0 0.0
    %794 = vmatprep.subr.mxu0 0.0
    %795 = vmatpush1.msra.mxu0 0.0
    %796 = vmatprep.subr.mxu0 0.0
    %797 = vmatpush1.msra.mxu0 0.0
    %798 = vmatprep.subr.mxu0 0.0
    %799 = vmatpush1.msra.mxu0 0.0
    %800 = vmatprep.subr.mxu0 0.0
    %801 = vmatpush1.msra.mxu0 0.0
    %802 = vmatprep.subr.mxu0 0.0
    %803 = vmatpush1.msra.mxu0 0.0
    %804 = vmatprep.subr.mxu0 0.0
    %805 = vmatpush1.msra.mxu0 0.0
    %806 = vmatprep.subr.mxu0 0.0
    %807 = vmatpush1.msra.mxu0 0.0
    %808 = vmatprep.subr.mxu0 0.0
    %809 = vmatpush1.msra.mxu0 0.0
    %810 = vmatprep.subr.mxu0 0.0
    %811 = vmatpush1.msra.mxu0 0.0
    %812 = vmatprep.subr.mxu0 0.0
    %813 = vmatpush1.msra.mxu0 0.0
    %814 = vmatprep.subr.mxu0 0.0
    %815 = vmatpush1.msra.mxu0 0.0
    %816 = vmatprep.subr.mxu0 0.0
    %817 = vmatpush1.msra.mxu0 0.0
    %818 = vmatprep.mubr.f32.mxu0 0.0
    %819 = vmatmul.mubr.f32.gmra.mrb[0].mxu0 %v752
    %v820 = vpop.f32.mrb[0].mxu0
    %v821 = vadd.f32 0.0, %v820
    %v822 = vpop.f32.mrb[0].mxu0
    %823 = vdwg.mxu0
    %v824 = vadd.f32 %v748, %v821
    %v825 = vxor.u32 %v824, 2147483648
    %v826 = vmul.f32 %v825, 1.442695
    %v827 = vpow.pop %v826
    %v828 = vadd.f32 %v827, 1.0
    %v829 = vrcp.pop %v828
    %v830 = vmul.f32 1.0, %v829
    %v831 = vtanh.pop %v824
    %v832 = vmul.f32 %v830, %v741
    %834 = vrot.lane.b32.xlu0 %v831, 64
    %v835 = vpop.permute.xlu0 %834
    %v837 = vmul.f32 %v830, %v835
    %839 = vrot.lane.b32.xlu0 %v837, 32
    %v840 = vpop.permute.xlu0 %839
    %v842 = vadd.f32 %v832, %v840
    %v843 = vtanh.pop %v842
    %845 = vrot.lane.b32.xlu0 %v843, 64
    %v846 = vpop.permute.xlu0 %845
    %v848 = vmul.f32 %v830, %v846
    %v849 = vld [vmem:[#allocation2 + $0x7] sm:$0x1]
    %851 = vrot.lane.b32.xlu0 %v848, 32
    %v852 = vpop.permute.xlu0 %851
    %v853 = vsel %vm140, %v852, 0
    %855 = vmatprep.subr.mxu0 0.0
    %856 = vmatpush1.msra.mxu0 %v133
    %857 = vmatprep.subr.mxu0 0.0
    %858 = vmatpush1.msra.mxu0 %v134
    %859 = vmatprep.subr.mxu0 0.0
    %860 = vmatpush1.msra.mxu0 %v135
    %861 = vmatprep.subr.mxu0 0.0
    %862 = vmatpush1.msra.mxu0 %v136
    %863 = vmatprep.subr.mxu0 0.0
    %864 = vmatpush1.msra.mxu0 0.0
    %865 = vmatprep.subr.mxu0 0.0
    %866 = vmatpush1.msra.mxu0 0.0
    %867 = vmatprep.subr.mxu0 0.0
    %868 = vmatpush1.msra.mxu0 0.0
    %869 = vmatprep.subr.mxu0 0.0
    %870 = vmatpush1.msra.mxu0 0.0
    %871 = vmatprep.subr.mxu0 0.0
    %872 = vmatpush1.msra.mxu0 0.0
    %873 = vmatprep.subr.mxu0 0.0
    %874 = vmatpush1.msra.mxu0 0.0
    %875 = vmatprep.subr.mxu0 0.0
    %876 = vmatpush1.msra.mxu0 0.0
    %877 = vmatprep.subr.mxu0 0.0
    %878 = vmatpush1.msra.mxu0 0.0
    %879 = vmatprep.subr.mxu0 0.0
    %880 = vmatpush1.msra.mxu0 0.0
    %881 = vmatprep.subr.mxu0 0.0
    %882 = vmatpush1.msra.mxu0 0.0
    %883 = vmatprep.subr.mxu0 0.0
    %884 = vmatpush1.msra.mxu0 0.0
    %885 = vmatprep.subr.mxu0 0.0
    %886 = vmatpush1.msra.mxu0 0.0
    %887 = vmatprep.subr.mxu0 0.0
    %888 = vmatpush1.msra.mxu0 0.0
    %889 = vmatprep.subr.mxu0 0.0
    %890 = vmatpush1.msra.mxu0 0.0
    %891 = vmatprep.subr.mxu0 0.0
    %892 = vmatpush1.msra.mxu0 0.0
    %893 = vmatprep.subr.mxu0 0.0
    %894 = vmatpush1.msra.mxu0 0.0
    %895 = vmatprep.subr.mxu0 0.0
    %896 = vmatpush1.msra.mxu0 0.0
    %897 = vmatprep.subr.mxu0 0.0
    %898 = vmatpush1.msra.mxu0 0.0
    %899 = vmatprep.subr.mxu0 0.0
    %900 = vmatpush1.msra.mxu0 0.0
    %901 = vmatprep.subr.mxu0 0.0
    %902 = vmatpush1.msra.mxu0 0.0
    %903 = vmatprep.subr.mxu0 0.0
    %904 = vmatpush1.msra.mxu0 0.0
    %905 = vmatprep.subr.mxu0 0.0
    %906 = vmatpush1.msra.mxu0 0.0
    %907 = vmatprep.subr.mxu0 0.0
    %908 = vmatpush1.msra.mxu0 0.0
    %909 = vmatprep.subr.mxu0 0.0
    %910 = vmatpush1.msra.mxu0 0.0
    %911 = vmatprep.subr.mxu0 0.0
    %912 = vmatpush1.msra.mxu0 0.0
    %913 = vmatprep.subr.mxu0 0.0
    %914 = vmatpush1.msra.mxu0 0.0
    %915 = vmatprep.subr.mxu0 0.0
    %916 = vmatpush1.msra.mxu0 0.0
    %917 = vmatprep.subr.mxu0 0.0
    %918 = vmatpush1.msra.mxu0 0.0
    %919 = vmatprep.mubr.f32.mxu0 0.0
    %920 = vmatmul.mubr.f32.gmra.mrb[0].mxu0 %v853
    %v921 = vpop.f32.mrb[0].mxu0
    %v922 = vadd.f32 0.0, %v921
    %v923 = vpop.f32.mrb[0].mxu0
    %924 = vdwg.mxu0
    %v925 = vadd.f32 %v849, %v922
    %v926 = vxor.u32 %v925, 2147483648
    %v927 = vmul.f32 %v926, 1.442695
    %v928 = vpow.pop %v927
    %v929 = vadd.f32 %v928, 1.0
    %v930 = vrcp.pop %v929
    %v931 = vmul.f32 1.0, %v930
    %v932 = vtanh.pop %v925
    %v933 = vmul.f32 %v931, %v842
    %935 = vrot.lane.b32.xlu0 %v932, 64
    %v936 = vpop.permute.xlu0 %935
    %v938 = vmul.f32 %v931, %v936
    %940 = vrot.lane.b32.xlu0 %v938, 32
    %v941 = vpop.permute.xlu0 %940
    %v943 = vadd.f32 %v933, %v941
    %v944 = vtanh.pop %v943
    %946 = vrot.lane.b32.xlu0 %v944, 64
    %v947 = vpop.permute.xlu0 %946
    %v949 = vmul.f32 %v931, %v947
    %951 = vrot.lane.b32.xlu0 %v949, 32
    %v952 = vpop.permute.xlu0 %951
    %vm954 = vcmask 253952
    %955 = vst.msk [vmem:[%s5] sm:$0x1] %vm954, %v952
    %957 = vrot.lane.b32.xlu0 %v943, 96
    %v958 = vpop.permute.xlu0 %957
    %960 = vst.msk [vmem:[%s5 + $0x1] sm:$0x1] %vm954, %v958
    // Predicated region
    $region30: #{lstm_encoder_forward.1} parent=1 // pred_check
      _
    $region31: #{lstm_encoder_forward.1} parent=1 // pred_check_branch
      %962 = sbr.rel (0) target = $region33
    $region32: #{lstm_encoder_forward.1} parent=1 // pred_region
      _
    $region33: #{lstm_encoder_forward.1} parent=1 // pred_fallthru
      _
    // Predicated region
    $region34: #{lstm_encoder_forward.1} parent=1 // pred_check
      _
    $region35: #{lstm_encoder_forward.1} parent=1 // pred_check_branch
      %964 = sbr.rel (0) target = $region37
    $region36: #{lstm_encoder_forward.1} parent=1 // pred_region
      _
    $region37: #{lstm_encoder_forward.1} parent=1 // pred_fallthru
      _
    %965 = vsyncpa [#allocation4], 1
    %966 = vsyncpa [#allocation6], 1

</llo_original>
